<compile_context>
chip_gen: v5e
topology: v5e:2x2
jax: 0.10.0
libtpu: 0.0.40
codegen_flags: <defaults>
</compile_context>

<pallas_src>
import jax
import jax.numpy as jnp
from jax.experimental import pallas as pl
from jax.experimental.pallas import tpu as pltpu


def _round_up(n, m):
    return ((n + m - 1) // m) * m


def ccacs_kernel(t_ref, x_ref, w1_ref, b1_ref, w2_ref, b2_ref, w3_ref, b3_ref,
                 out_ref):
    """Fused temperature-scaling + 3-layer MLP for one batch tile.

    t_ref : SMEM (1,)        temperature scalar
    x_ref : VMEM (TB, 10)    batch tile
    w1    : VMEM (10, 50)    b1: (1, 50)
    w2    : VMEM (50, 20)    b2: (1, 20)
    w3    : VMEM (20, 1)     b3: (1, 1)
    out   : VMEM (TB, 11)    [:, :10] = x / T,  [:, 10:] = MLP(x)
    """
    x = x_ref[...]

    # MLP hot path: MXU matmuls (f32 accumulation) + VPU relu.
    h1 = jnp.dot(x, w1_ref[...], preferred_element_type=jnp.float32) + b1_ref[...]
    h1 = jnp.maximum(h1, 0.0)
    h2 = jnp.dot(h1, w2_ref[...], preferred_element_type=jnp.float32) + b2_ref[...]
    h2 = jnp.maximum(h2, 0.0)
    y = jnp.dot(h2, w3_ref[...], preferred_element_type=jnp.float32) + b3_ref[...]

    # Temperature scaling of the raw logits, fused into ONE store of the tile.
    inv_t = 1.0 / t_ref[0]
    out_ref[...] = jnp.concatenate([x * inv_t, y], axis=-1)


def ccacs_forward(x, params, *, block_rows=4096):
    """params = dict(temperature, w1, b1, w2, b2, w3, b3); shapes as in kernel.

    x: (B, 10) -> (B, 11)
    """
    x = x.astype(jnp.float32)
    B, F = x.shape
    assert F == 10, f"expected 10 input features, got {F}"

    # Batch tile: multiple of 8 sublanes, capped at block_rows. Pad B up to a
    # multiple of the tile so every grid step sees a full, in-bounds block.
    tb = min(block_rows, _round_up(B, 8))
    b_pad = _round_up(B, tb)
    if b_pad != B:
        x = jnp.pad(x, ((0, b_pad - B), (0, 0)))
    grid = (b_pad // tb,)

    t = params["temperature"].reshape((1,)).astype(jnp.float32)

    def const_spec(shape):
        # Whole (tiny) weight/bias, same block every grid step -> VMEM-resident.
        return pl.BlockSpec(shape, lambda i: (0, 0))

    out = pl.pallas_call(
        ccacs_kernel,
        out_shape=jax.ShapeDtypeStruct((b_pad, 11), jnp.float32),
        grid=grid,
        in_specs=[
            pl.BlockSpec((1,), lambda i: (0,),
                         memory_space=pltpu.MemorySpace.SMEM),   # temperature
            pl.BlockSpec((tb, 10), lambda i: (i, 0)),            # x tile
            const_spec((10, 50)), const_spec((1, 50)),           # w1, b1
            const_spec((50, 20)), const_spec((1, 20)),           # w2, b2
            const_spec((20, 1)),  const_spec((1, 1)),            # w3, b3
        ],
        out_specs=pl.BlockSpec((tb, 11), lambda i: (i, 0)),
        compiler_params=pltpu.CompilerParams(
            dimension_semantics=("parallel",)),                  # megacore on v7x
    )(
        t, x,
        params["w1"], params["b1"],
        params["w2"], params["b2"],
        params["w3"], params["b3"],
    )

    return out[:B] if b_pad != B else out


def init_params(key):
    """Deterministic init mimicking PyTorch Linear default uniform(-1/sqrt(fan_in))."""
    k1, k2, k3, k4, k5, k6 = jax.random.split(key, 6)

    def lin(kw, kb, fan_in, fan_out):
        bound = 1.0 / jnp.sqrt(fan_in)
        w = jax.random.uniform(kw, (fan_in, fan_out), jnp.float32, -bound, bound)
        b = jax.random.uniform(kb, (1, fan_out), jnp.float32, -bound, bound)
        return w, b

    w1, b1 = lin(k1, k2, 10, 50)
    w2, b2 = lin(k3, k4, 50, 20)
    w3, b3 = lin(k5, k6, 20, 1)
    return {
        "temperature": jnp.ones((1,), jnp.float32),
        "w1": w1, "b1": b1,
        "w2": w2, "b2": b2,
        "w3": w3, "b3": b3,
    }


def reference_forward(x, params):
    """Pure-JAX reference of the PyTorch forward."""
    h1 = jnp.maximum(x @ params["w1"] + params["b1"], 0.0)
    h2 = jnp.maximum(h1 @ params["w2"] + params["b2"], 0.0)
    y = h2 @ params["w3"] + params["b3"]
    return jnp.concatenate([x / params["temperature"][0], y], axis=-1)


if __name__ == "__main__":
    key = jax.random.PRNGKey(0)
    kp, kx1, kx2 = jax.random.split(key, 3)

    params = init_params(kp)
    # Non-trivial temperature to exercise the scaling path.
    params["temperature"] = jnp.array([1.5], jnp.float32)

    # Small batch (single tile).
    B = 8
    x = jax.random.normal(kx1, (B, 10), jnp.float32)
    out = jax.block_until_ready(ccacs_forward(x, params))
    ref = reference_forward(x, params)
    assert out.shape == (B, 11), out.shape
    assert jnp.allclose(out, ref, atol=1e-5, rtol=1e-5), (
        f"max abs err {jnp.max(jnp.abs(out - ref))}")

    # Ragged batch + multi-step grid (exercises padding + pipelined tiles).
    B2 = 100
    x2 = jax.random.normal(kx2, (B2, 10), jnp.float32)
    out2 = jax.block_until_ready(ccacs_forward(x2, params, block_rows=32))
    ref2 = reference_forward(x2, params)
    assert out2.shape == (B2, 11), out2.shape
    assert jnp.allclose(out2, ref2, atol=1e-5, rtol=1e-5), (
        f"max abs err {jnp.max(jnp.abs(out2 - ref2))}")

    print("KERNEL_OK")
</pallas_src>

<mosaic_0001>
module attributes {stable_mosaic.version = 11 : i64} {
  func.func @ccacs_kernel(%arg0: i32, %arg1: memref<1xf32, #tpu.memory_space<smem>>, %arg2: memref<8x10xf32, #tpu.memory_space<vmem>>, %arg3: memref<10x50xf32, #tpu.memory_space<vmem>>, %arg4: memref<1x50xf32, #tpu.memory_space<vmem>>, %arg5: memref<50x20xf32, #tpu.memory_space<vmem>>, %arg6: memref<1x20xf32, #tpu.memory_space<vmem>>, %arg7: memref<20x1xf32, #tpu.memory_space<vmem>>, %arg8: memref<1x1xf32, #tpu.memory_space<vmem>>, %arg9: memref<8x11xf32, #tpu.memory_space<vmem>>) attributes {dimension_semantics = [#tpu.dimension_semantics<parallel>], iteration_bounds = array<i64: 1>, scalar_prefetch = 0 : i64, scratch_operands = 0 : i64, tpu.core_type = #tpu.core_type<tc>, window_params = [{transform_indices = @transform_0, window_bounds = array<i64: 1>}, {transform_indices = @transform_1, window_bounds = array<i64: 8, 10>}, {pipeline_mode = #tpu.pipeline_mode<synchronous>, transform_indices = @transform_2, window_bounds = array<i64: 10, 50>}, {pipeline_mode = #tpu.pipeline_mode<synchronous>, transform_indices = @transform_3, window_bounds = array<i64: 1, 50>}, {pipeline_mode = #tpu.pipeline_mode<synchronous>, transform_indices = @transform_4, window_bounds = array<i64: 50, 20>}, {pipeline_mode = #tpu.pipeline_mode<synchronous>, transform_indices = @transform_5, window_bounds = array<i64: 1, 20>}, {pipeline_mode = #tpu.pipeline_mode<synchronous>, transform_indices = @transform_6, window_bounds = array<i64: 20, 1>}, {pipeline_mode = #tpu.pipeline_mode<synchronous>, transform_indices = @transform_7, window_bounds = array<i64: 1, 1>}, {transform_indices = @transform_8, window_bounds = array<i64: 8, 11>}]} {
    %c0 = arith.constant 0 : index
    %c0_0 = arith.constant 0 : index
    %0 = vector.load %arg2[%c0, %c0_0] : memref<8x10xf32, #tpu.memory_space<vmem>>, vector<8x10xf32>
    %c0_1 = arith.constant 0 : index
    %c0_2 = arith.constant 0 : index
    %1 = vector.load %arg3[%c0_1, %c0_2] : memref<10x50xf32, #tpu.memory_space<vmem>>, vector<10x50xf32>
    %cst = arith.constant dense<0.000000e+00> : vector<8x50xf32>
    %2 = tpu.matmul %0, %1, %cst {dimension_numbers = #tpu.dot_dimension_numbers<[1], [0], [0], [1], [0, 0, 1, 1], [], []>} : vector<8x10xf32>, vector<10x50xf32>, vector<8x50xf32> -> vector<8x50xf32>
    %c0_3 = arith.constant 0 : index
    %c0_4 = arith.constant 0 : index
    %3 = vector.load %arg4[%c0_3, %c0_4] : memref<1x50xf32, #tpu.memory_space<vmem>>, vector<1x50xf32>
    %4 = vector.broadcast %3 : vector<1x50xf32> to vector<8x50xf32>
    %5 = arith.addf %2, %4 : vector<8x50xf32>
    %cst_5 = arith.constant 0.000000e+00 : f32
    %6 = vector.broadcast %cst_5 : f32 to vector<8x50xf32>
    %7 = arith.maximumf %5, %6 : vector<8x50xf32>
    %c0_6 = arith.constant 0 : index
    %c0_7 = arith.constant 0 : index
    %8 = vector.load %arg5[%c0_6, %c0_7] : memref<50x20xf32, #tpu.memory_space<vmem>>, vector<50x20xf32>
    %cst_8 = arith.constant dense<0.000000e+00> : vector<8x20xf32>
    %9 = tpu.matmul %7, %8, %cst_8 {dimension_numbers = #tpu.dot_dimension_numbers<[1], [0], [0], [1], [0, 0, 1, 1], [], []>} : vector<8x50xf32>, vector<50x20xf32>, vector<8x20xf32> -> vector<8x20xf32>
    %c0_9 = arith.constant 0 : index
    %c0_10 = arith.constant 0 : index
    %10 = vector.load %arg6[%c0_9, %c0_10] : memref<1x20xf32, #tpu.memory_space<vmem>>, vector<1x20xf32>
    %11 = vector.broadcast %10 : vector<1x20xf32> to vector<8x20xf32>
    %12 = arith.addf %9, %11 : vector<8x20xf32>
    %cst_11 = arith.constant 0.000000e+00 : f32
    %13 = vector.broadcast %cst_11 : f32 to vector<8x20xf32>
    %14 = arith.maximumf %12, %13 : vector<8x20xf32>
    %c0_12 = arith.constant 0 : index
    %c0_13 = arith.constant 0 : index
    %15 = vector.load %arg7[%c0_12, %c0_13] : memref<20x1xf32, #tpu.memory_space<vmem>>, vector<20x1xf32>
    %cst_14 = arith.constant dense<0.000000e+00> : vector<8x1xf32>
    %16 = tpu.matmul %14, %15, %cst_14 {dimension_numbers = #tpu.dot_dimension_numbers<[1], [0], [0], [1], [0, 0, 1, 1], [], []>} : vector<8x20xf32>, vector<20x1xf32>, vector<8x1xf32> -> vector<8x1xf32>
    %c0_15 = arith.constant 0 : index
    %c0_16 = arith.constant 0 : index
    %17 = vector.load %arg8[%c0_15, %c0_16] : memref<1x1xf32, #tpu.memory_space<vmem>>, vector<1x1xf32>
    %18 = vector.broadcast %17 : vector<1x1xf32> to vector<8x1xf32>
    %19 = arith.addf %16, %18 : vector<8x1xf32>
    %c0_17 = arith.constant 0 : index
    %20 = memref.load %arg1[%c0_17] : memref<1xf32, #tpu.memory_space<smem>>
    %cst_18 = arith.constant 1.000000e+00 : f32
    %21 = arith.divf %cst_18, %20 : f32
    %22 = vector.broadcast %21 : f32 to vector<8x10xf32>
    %23 = arith.mulf %0, %22 : vector<8x10xf32>
    %24 = tpu.concatenate %23, %19 in 1 : vector<8x10xf32>, vector<8x1xf32> -> vector<8x11xf32>
    %c0_19 = arith.constant 0 : index
    %c0_20 = arith.constant 0 : index
    %25 = vector.load %arg9[%c0_19, %c0_20] : memref<8x11xf32, #tpu.memory_space<vmem>>, vector<8x11xf32>
    tpu.vector_store %arg9[%c0_19, %c0_20], %24 {strides = array<i32>} : memref<8x11xf32, #tpu.memory_space<vmem>>, vector<8x11xf32>,
    return
  }
  func.func @transform_0(%arg0: i32) -> i32 {
    %c0_i32 = arith.constant 0 : i32
    %c0_i32_0 = arith.constant 0 : i32
    return %c0_i32 : i32
  }
  func.func @transform_1(%arg0: i32) -> (i32, i32) {
    %c0_i32 = arith.constant 0 : i32
    %c0_i32_0 = arith.constant 0 : i32
    return %arg0, %c0_i32 : i32, i32
  }
  func.func @transform_2(%arg0: i32) -> (i32, i32) {
    %c0_i32 = arith.constant 0 : i32
    %c0_i32_0 = arith.constant 0 : i32
    %c0_i32_1 = arith.constant 0 : i32
    return %c0_i32, %c0_i32_0 : i32, i32
  }
  func.func @transform_3(%arg0: i32) -> (i32, i32) {
    %c0_i32 = arith.constant 0 : i32
    %c0_i32_0 = arith.constant 0 : i32
    %c0_i32_1 = arith.constant 0 : i32
    return %c0_i32, %c0_i32_0 : i32, i32
  }
  func.func @transform_4(%arg0: i32) -> (i32, i32) {
    %c0_i32 = arith.constant 0 : i32
    %c0_i32_0 = arith.constant 0 : i32
    %c0_i32_1 = arith.constant 0 : i32
    return %c0_i32, %c0_i32_0 : i32, i32
  }
  func.func @transform_5(%arg0: i32) -> (i32, i32) {
    %c0_i32 = arith.constant 0 : i32
    %c0_i32_0 = arith.constant 0 : i32
    %c0_i32_1 = arith.constant 0 : i32
    return %c0_i32, %c0_i32_0 : i32, i32
  }
  func.func @transform_6(%arg0: i32) -> (i32, i32) {
    %c0_i32 = arith.constant 0 : i32
    %c0_i32_0 = arith.constant 0 : i32
    %c0_i32_1 = arith.constant 0 : i32
    return %c0_i32, %c0_i32_0 : i32, i32
  }
  func.func @transform_7(%arg0: i32) -> (i32, i32) {
    %c0_i32 = arith.constant 0 : i32
    %c0_i32_0 = arith.constant 0 : i32
    %c0_i32_1 = arith.constant 0 : i32
    return %c0_i32, %c0_i32_0 : i32, i32
  }
  func.func @transform_8(%arg0: i32) -> (i32, i32) {
    %c0_i32 = arith.constant 0 : i32
    %c0_i32_0 = arith.constant 0 : i32
    return %arg0, %c0_i32 : i32, i32
  }
}

</mosaic_0001>

<llo_original>
// kernel: tpu_custom_call.1
$region0: #{tpu_custom_call.1}
  #allocation0 [shape = 'u32[]', space=smem, size = 0x4, offset = 0x4, fixed_abs, tag = 'smem constant byte address 0x4 - core index']
  #allocation1 [shape = 'u32[72,128]{1,0:T(1,128)}', space=vmem, size = 0x9000, scoped, tag = 'internal scratch']
  #allocation2 [shape = 'f32[1]{0:T(128)S(6)}', space=smem, size = 0x200, scoped, tag = 'scoped memory for tpu_custom_call.1']
  #allocation3 [shape = 'f32[1,1]{1,0:T(1,128)S(1)}', space=vmem, size = 0x200, scoped, tag = 'scoped memory for tpu_custom_call.1']
  %s0 = inlined_call_operand.<no memory space> [shape: f32[1], index: 0, kind: input, shape index: {}]
  %s1 = inlined_call_operand.vmem [shape: f32[8,10], index: 1, kind: input, shape index: {}]
  %s2 = inlined_call_operand.vmem [shape: f32[10,50], index: 2, kind: input, shape index: {}]
  %s3 = inlined_call_operand.vmem [shape: f32[1,50], index: 3, kind: input, shape index: {}]
  %s4 = inlined_call_operand.vmem [shape: f32[50,20], index: 4, kind: input, shape index: {}]
  %s5 = inlined_call_operand.vmem [shape: f32[1,20], index: 5, kind: input, shape index: {}]
  %s6 = inlined_call_operand.vmem [shape: f32[20,1], index: 6, kind: input, shape index: {}]
  %s7 = inlined_call_operand.<no memory space> [shape: f32[1,1], index: 7, kind: input, shape index: {}]
  %s8 = inlined_call_operand.hbm [shape: f32[8,11], index: 8, kind: output, shape index: {}]
  %s9 = sld [smem:[#allocation0]]
  $region42: #{tpu_custom_call.1} parent=0
    _
  %s11 = ssub.s32 1, %s9
  %s12 = scalar_select 0, %s11, %s9
  %13 = sst [smem:[#allocation2]] %s0
  %v14 = vstv %s7
  %15 = vst [vmem:[#allocation3] sm:$0x1] %v14
  $region1: #{tpu_custom_call.1} parent=0
    #allocation4 [shape = 'u8[4096]{0}', space=vmem, size = 0x1000, scoped, tag = 'output window, operand 0, single buffered']
    #allocation5 [shape = 's32[1]{0}', space=sflag, size = 0x4, scoped, tag = 'scoped memory for tpu_custom_call.1']
    %16 = vsyncpa [#allocation5], 0
    // Predicated region
    $region2: #{tpu_custom_call.1} parent=1 // pred_check
      _
    $region3: #{tpu_custom_call.1} parent=1 // pred_check_branch
      %18 = sbr.rel (0) target = $region5
    $region4: #{tpu_custom_call.1} parent=1 // pred_region
      _
    $region5: #{tpu_custom_call.1} parent=1 // pred_fallthru
      _
    // Predicated region
    $region6: #{tpu_custom_call.1} parent=1 // pred_check
      _
    $region7: #{tpu_custom_call.1} parent=1 // pred_check_branch
      %20 = sbr.rel (0) target = $region9
    $region8: #{tpu_custom_call.1} parent=1 // pred_region
      _
    $region9: #{tpu_custom_call.1} parent=1 // pred_fallthru
      _
    // Predicated region
    $region10: #{tpu_custom_call.1} parent=1 // pred_check
      _
    $region11: #{tpu_custom_call.1} parent=1 // pred_check_branch
      %22 = sbr.rel (0) target = $region13
    $region12: #{tpu_custom_call.1} parent=1 // pred_region
      _
    $region13: #{tpu_custom_call.1} parent=1 // pred_fallthru
      _
    // Predicated region
    $region14: #{tpu_custom_call.1} parent=1 // pred_check
      _
    $region15: #{tpu_custom_call.1} parent=1 // pred_check_branch
      %24 = sbr.rel (0) target = $region17
    $region16: #{tpu_custom_call.1} parent=1 // pred_region
      _
    $region17: #{tpu_custom_call.1} parent=1 // pred_fallthru
      _
    // Predicated region
    $region18: #{tpu_custom_call.1} parent=1 // pred_check
      _
    $region19: #{tpu_custom_call.1} parent=1 // pred_check_branch
      %26 = sbr.rel (0) target = $region21
    $region20: #{tpu_custom_call.1} parent=1 // pred_region
      _
    $region21: #{tpu_custom_call.1} parent=1 // pred_fallthru
      _
    // Predicated region
    $region22: #{tpu_custom_call.1} parent=1 // pred_check
      _
    $region23: #{tpu_custom_call.1} parent=1 // pred_check_branch
      %28 = sbr.rel (0) target = $region25
    $region24: #{tpu_custom_call.1} parent=1 // pred_region
      _
    $region25: #{tpu_custom_call.1} parent=1 // pred_fallthru
      _
    // Predicated region
    $region26: #{tpu_custom_call.1} parent=1 // pred_check
      _
    $region27: #{tpu_custom_call.1} parent=1 // pred_check_branch
      %30 = sbr.rel (0) target = $region29
    $region28: #{tpu_custom_call.1} parent=1 // pred_region
      _
    $region29: #{tpu_custom_call.1} parent=1 // pred_fallthru
      _
    // Predicated region
    $region30: #{tpu_custom_call.1} parent=1 // pred_check
      _
    $region31: #{tpu_custom_call.1} parent=1 // pred_check_branch
      %32 = sbr.rel (0) target = $region33
    $region32: #{tpu_custom_call.1} parent=1 // pred_region
      _
    $region33: #{tpu_custom_call.1} parent=1 // pred_fallthru
      _
    %v33 = vld [vmem:[%s1] sm:$0xff]
    %v34 = vld [vmem:[%s2] sm:$0xff]
    %v35 = vld [vmem:[%s2 + $0x8] sm:$0x3]
    %v36 = vld [vmem:[%s3] sm:$0x1]
    %v38 = vperm.slane %v36, 0
    %vm40 = vcmask 80896
    %v42 = vsel %vm40, %v33, 0
    %vm44 = vcmask 1041408
    %v46 = vsel %vm44, %v35, 0
    %48 = vmatpush.msra.mxu0 0.0
    %49 = vmatpush.msra.mxu0 0.0
    %50 = vmatpush.msra.mxu0 0.0
    %51 = vmatpush.msra.mxu0 0.0
    %52 = vmatpush.msra.mxu0 0.0
    %53 = vmatpush.msra.mxu0 0.0
    %54 = vmatpush.msra.mxu0 0.0
    %55 = vmatpush.msra.mxu0 0.0
    %56 = vmatpush.msra.mxu0 0.0
    %57 = vmatpush.msra.mxu0 0.0
    %58 = vmatpush.msra.mxu0 0.0
    %59 = vmatpush.msra.mxu0 0.0
    %60 = vmatpush.msra.mxu0 0.0
    %61 = vmatpush.msra.mxu0 0.0
    %62 = vmatpush.msra.mxu0 %v46
    %63 = vmatpush.msra.mxu0 %v34
    %64 = vmatmul.f32.gmra.mxu0 %v42
    %v65 = vpop.f32.mrf.mxu0
    %v66 = vadd.f32 %v38, %v65
    %67 = vdwg.mxu0
    %v68 = vmax.f32 %v66, 0.0
    %v69 = vld [vmem:[%s4] sm:$0xff]
    %v70 = vld [vmem:[%s4 + $0x8] sm:$0xff]
    %v71 = vld [vmem:[%s4 + $0x10] sm:$0xff]
    %v72 = vld [vmem:[%s4 + $0x18] sm:$0xff]
    %v73 = vld [vmem:[%s4 + $0x20] sm:$0xff]
    %v74 = vld [vmem:[%s4 + $0x28] sm:$0xff]
    %v75 = vld [vmem:[%s4 + $0x30] sm:$0x3]
    %v76 = vld [vmem:[%s5] sm:$0x1]
    %v78 = vperm.slane %v76, 0
    %vm80 = vcmask 408576
    %v82 = vsel %vm80, %v68, 0
    %v85 = vsel %vm44, %v75, 0
    %87 = vmatpush.msra.mxu0 0.0
    %88 = vmatpush.msra.mxu0 0.0
    %89 = vmatpush.msra.mxu0 0.0
    %90 = vmatpush.msra.mxu0 0.0
    %91 = vmatpush.msra.mxu0 0.0
    %92 = vmatpush.msra.mxu0 0.0
    %93 = vmatpush.msra.mxu0 0.0
    %94 = vmatpush.msra.mxu0 0.0
    %95 = vmatpush.msra.mxu0 0.0
    %96 = vmatpush.msra.mxu0 %v85
    %97 = vmatpush.msra.mxu0 %v74
    %98 = vmatpush.msra.mxu0 %v73
    %99 = vmatpush.msra.mxu0 %v72
    %100 = vmatpush.msra.mxu0 %v71
    %101 = vmatpush.msra.mxu0 %v70
    %102 = vmatpush.msra.mxu0 %v69
    %103 = vmatmul.f32.gmra.mxu0 %v82
    %v104 = vpop.f32.mrf.mxu0
    %v105 = vadd.f32 %v78, %v104
    %106 = vdwg.mxu0
    %v107 = vmax.f32 %v105, 0.0
    %v108 = vld [vmem:[%s6] sm:$0xff]
    %v109 = vld [vmem:[%s6 + $0x8] sm:$0xff]
    %v110 = vld [vmem:[%s6 + $0x10] sm:$0xf]
    %v111 = vld [vmem:[#allocation3] sm:$0x1]
    %v113 = vperm.slane %v111, 0
    %vm115 = vcmask 162816
    %v117 = vsel %vm115, %v107, 0
    %vm119 = vcmask 1043456
    %v121 = vsel %vm119, %v110, 0
    %123 = vmatpush.msra.mxu0 0.0
    %124 = vmatpush.msra.mxu0 0.0
    %125 = vmatpush.msra.mxu0 0.0
    %126 = vmatpush.msra.mxu0 0.0
    %127 = vmatpush.msra.mxu0 0.0
    %128 = vmatpush.msra.mxu0 0.0
    %129 = vmatpush.msra.mxu0 0.0
    %130 = vmatpush.msra.mxu0 0.0
    %131 = vmatpush.msra.mxu0 0.0
    %132 = vmatpush.msra.mxu0 0.0
    %133 = vmatpush.msra.mxu0 0.0
    %134 = vmatpush.msra.mxu0 0.0
    %135 = vmatpush.msra.mxu0 0.0
    %136 = vmatpush.msra.mxu0 %v121
    %137 = vmatpush.msra.mxu0 %v109
    %138 = vmatpush.msra.mxu0 %v108
    %139 = vmatmul.f32.gmra.mxu0 %v117
    %v140 = vpop.f32.mrf.mxu0
    %v141 = vadd.f32 %v113, %v140
    %142 = vdwg.mxu0
    %s143 = sld [smem:[#allocation2]]
    %v144 = vstv %s143
    %v145 = vrcp.pop %v144
    %v146 = vmul.f32 %v144, %v145
    %v147 = vsub.f32 1.0, %v146
    %v148 = vmul.f32 %v145, %v147
    %v149 = vadd.f32 %v145, %v148
    %vm150 = vweird.f32 %v144
    %vm151 = vweird.f32 %v145
    %vm152 = vmor %vm150, %vm151
    %v153 = vsel %vm152, %v145, %v149
    %v154 = vand.u32 2147483647, %v144
    %vm155 = vcmp.eq.f32.partialorder %v154, 8.507059e+37
    %v156 = vand.u32 %v144, 2147483648
    %v157 = vor.u32 1.1754944e-38, %v156
    %v158 = vsel %vm155, %v157, %v153
    %s159 = vtos %v158
    %v160 = vstv %s159
    %v161 = vmul.f32 %v33, %v160
    %163 = vrot.lane.b32.xlu0 %v141, 10
    %v164 = vpop.permute.xlu0 %163
    %v166 = vsel %vm40, %v161, %v164
    %vm167 = vcmask 89088
    %168 = vst.msk [vmem:[#allocation4] sm:$0xff] %vm167, %v166
    // Predicated region
    $region34: #{tpu_custom_call.1} parent=1 // pred_check
      _
    $region35: #{tpu_custom_call.1} parent=1 // pred_check_branch
      %170 = sbr.rel (0) target = $region37
    $region36: #{tpu_custom_call.1} parent=1 // pred_region
      %172 = vsyncadd [#allocation5], 0
      %s174 = sshll.u32 [#allocation4], 4
      %s175 = int_to_ptr.vmem [resolvable:$true] %s174
      %s176 = sshll.u32 %s8, 4
      %s177 = int_to_ptr.hbm [resolvable:$true] %s176
      %179 = dma.vmem_to_hbm [thread:$0]  %s175, 128, %s177, [#allocation5]
    $region37: #{tpu_custom_call.1} parent=1 // pred_fallthru
      _
    // Predicated region
    $region38: #{tpu_custom_call.1} parent=1 // pred_check
      _
    $region39: #{tpu_custom_call.1} parent=1 // pred_check_branch
      %181 = sbr.rel (0) target = $region41
    $region40: #{tpu_custom_call.1} parent=1 // pred_region
      %183 = dma.done [#allocation5], 128
    $region41: #{tpu_custom_call.1} parent=1 // pred_fallthru
      _
    %184 = vsyncpa [#allocation5], 1

</llo_original>
